<compile_context>
chip_gen: v5e
topology: v5e:2x2
jax: 0.10.0
libtpu: 0.0.40
codegen_flags: <defaults>
</compile_context>

<pallas_src>
import jax
import jax.numpy as jnp
from jax.experimental import pallas as pl
from jax.experimental.pallas import tpu as pltpu


def _choose_tile_rows(hq, w):
    """Output rows per grid step (Th).  Each block covers Lb = 2*Th*W lanes.

    When tiling (Th < Hq) require Lb % 512 == 0 so the input block (Lb lanes)
    and the output block (Lb/4 lanes) are both 128-lane aligned.  Prefer a few
    thousand lanes; otherwise fall back to the whole image (block == full array
    dim, which is always legal)."""
    best = None
    for th in range(1, hq + 1):
        if hq % th:
            continue
        lb = 2 * th * w
        if lb > 8192:
            break
        if lb % 512 == 0 and lb >= 512:
            best = th
    return best if best is not None else hq


def _make_td_kernel(n_row_pairs, w_img, wq, out_dtype):
    """Kernel body.  Refs (in order):
      w_ref  : (K, C)       bf16  1x1 conv weight
      b_ref  : (K, 1)       f32   conv bias
      bn_ref : (C, 2)       f32   [:,0]=scale, [:,1]=shift (folded eval BN)
      p_ref  : (W-1, Wq)    bf16  constant 0/1 column-selection matrix
      x_ref  : (1, C, Lb)   in-dtype, Lb = 2*Th*W flattened NCHW rows
      o_ref  : (1, K, Th*Wq) out-dtype
    """
    lb = 2 * n_row_pairs * w_img
    lsel = lb - w_img - 1

    def kernel(w_ref, b_ref, bn_ref, p_ref, x_ref, o_ref):
        x = x_ref[0].astype(jnp.float32)                 # (C, Lb)
        scale = bn_ref[:, 0:1]                           # (C, 1)
        shift = bn_ref[:, 1:2]                           # (C, 1)
        # BN (eval-mode affine) + ReLU in f32 (v5e-safe), then bf16 for the MXU.
        a = jnp.maximum(x * scale + shift, 0.0).astype(jnp.bfloat16)

        # 1x1 conv == one MXU matmul over channels, f32 accumulation.
        y = jnp.dot(w_ref[...], a, preferred_element_type=jnp.float32)
        y = y + b_ref[...]                                # (K, Lb) f32

        # MaxPool 2x2/2, step 1: elementwise max of the 4 window corners using
        # cheap *contiguous* lane-shift slices (no strided lane access):
        #   m[:, l] = max(y[l], y[l+1], y[l+W], y[l+W+1]);
        # valid pooled values sit at l = 2*i*W + 2*j.
        m = jnp.maximum(
            jnp.maximum(y[:, 0:lsel], y[:, 1:lsel + 1]),
            jnp.maximum(y[:, w_img:w_img + lsel],
                        y[:, w_img + 1:w_img + 1 + lsel]),
        ).astype(jnp.bfloat16)

        # Step 2: per output row, compact "keep every other column" with a tiny
        # MXU matmul against a constant 0/1 selection matrix (guaranteed
        # lowering; ~Wq/(4C) of the conv flops, well inside MXU slack).
        for i in range(n_row_pairs):
            seg = m[:, 2 * i * w_img: 2 * i * w_img + (w_img - 1)]  # (K, W-1)
            row = jnp.dot(seg, p_ref[...], preferred_element_type=jnp.float32)
            o_ref[0, :, i * wq:(i + 1) * wq] = row.astype(out_dtype)

    return kernel


def transition_down(x_nchw, w_oihw, bias, scale, shift):
    """x: (N,C,H,W) float (bf16 recommended); w: (K,C,1,1); bias: (K,);
    scale/shift: (C,) folded eval-mode BN.  Returns (N,K,H//2,W//2) in x.dtype."""
    N, C, H, W = x_nchw.shape
    K = w_oihw.shape[0]
    Hq, Wq = H // 2, W // 2
    # MaxPool2d(2) floors odd spatial sizes; crop (no-op when already even).
    if (H % 2) or (W % 2):
        x_nchw = x_nchw[:, :, :2 * Hq, :2 * Wq]
        H, W = 2 * Hq, 2 * Wq

    # Free (bitcast) reshape only — no HBM transpose pass before the kernel.
    x_flat = x_nchw.reshape(N, C, H * W)

    th = _choose_tile_rows(Hq, W)        # output rows per grid step
    n_tiles = Hq // th
    lb = 2 * th * W                      # input lanes per block
    lbq = th * Wq                        # output lanes per block

    w2 = w_oihw.reshape(K, C).astype(jnp.bfloat16)
    b2 = bias.reshape(K, 1).astype(jnp.float32)
    bn = jnp.stack([scale.astype(jnp.float32),
                    shift.astype(jnp.float32)], axis=-1)          # (C, 2)
    # Constant column-selection matrix: picks even columns (W-1 -> Wq).
    psel = (jnp.arange(W - 1)[:, None] == 2 * jnp.arange(Wq)[None, :]
            ).astype(jnp.bfloat16)

    out_dtype = x_nchw.dtype
    itemsize = jnp.dtype(out_dtype).itemsize
    kernel = _make_td_kernel(th, W, Wq, out_dtype)

    # VMEM budget: double-buffered x/out blocks + params + f32 intermediates.
    vmem_bytes = (2 * C * lb * itemsize + 2 * K * lbq * itemsize
                  + C * lb * 2 + 3 * K * lb * 4
                  + (K * C + (W - 1) * Wq) * 2 + (K + 2 * C) * 4)
    vmem_limit = int(min(max(2 * vmem_bytes + (4 << 20), 16 << 20), 48 << 20))

    cost = pl.CostEstimate(
        flops=2 * N * K * C * H * W + 2 * N * Hq * K * (W - 1) * Wq,
        transcendentals=0,
        bytes_accessed=(x_flat.size * itemsize + N * K * Hq * Wq * itemsize
                        + (K * C + (W - 1) * Wq) * 2 + (K + 2 * C) * 4),
    )

    out = pl.pallas_call(
        kernel,
        out_shape=jax.ShapeDtypeStruct((N, K, Hq * Wq), out_dtype),
        grid_spec=pltpu.PrefetchScalarGridSpec(
            num_scalar_prefetch=0,
            grid=(N, n_tiles),
            in_specs=[
                pl.BlockSpec((K, C), lambda n, t: (0, 0)),
                pl.BlockSpec((K, 1), lambda n, t: (0, 0)),
                pl.BlockSpec((C, 2), lambda n, t: (0, 0)),
                pl.BlockSpec((W - 1, Wq), lambda n, t: (0, 0)),
                pl.BlockSpec((1, C, lb), lambda n, t: (n, 0, t)),
            ],
            out_specs=pl.BlockSpec((1, K, lbq), lambda n, t: (n, 0, t)),
        ),
        compiler_params=pltpu.CompilerParams(
            dimension_semantics=("parallel", "parallel"),
            vmem_limit_bytes=vmem_limit,
        ),
        cost_estimate=cost,
    )(w2, b2, bn, psel, x_flat)

    return out.reshape(N, K, Hq, Wq)


def init_transition_down_params(key, n_channels_in, n_channels_out=None):
    """Deterministic synthetic parameters matching the PyTorch module."""
    if n_channels_out is None:
        n_channels_out = n_channels_in
    c_in, c_out = n_channels_in, n_channels_out
    key, k1, k2, k3, k4, k5, k6 = jax.random.split(key, 7)
    w = jax.random.normal(k1, (c_out, c_in, 1, 1), jnp.float32) / jnp.sqrt(
        jnp.float32(c_in))
    b = 0.1 * jax.random.normal(k2, (c_out,), jnp.float32)
    gamma = 1.0 + 0.1 * jax.random.normal(k3, (c_in,), jnp.float32)
    beta = 0.1 * jax.random.normal(k4, (c_in,), jnp.float32)
    running_mean = 0.1 * jax.random.normal(k5, (c_in,), jnp.float32)
    running_var = jnp.abs(jax.random.normal(k6, (c_in,), jnp.float32)) + 0.5
    eps = 1e-5
    scale = gamma / jnp.sqrt(running_var + eps)
    shift = beta - running_mean * scale
    return w, b, scale, shift


def transition_down_reference(x, w_oihw, bias, scale, shift):
    """Pure-JAX f32 reference (BN->ReLU->1x1 conv->2x2 max pool)."""
    xf = x.astype(jnp.float32)
    a = jnp.maximum(
        xf * scale[None, :, None, None] + shift[None, :, None, None], 0.0)
    wf = w_oihw.reshape(w_oihw.shape[0], -1).astype(jnp.float32)
    y = jnp.einsum("kc,nchw->nkhw", wf, a) + bias[None, :, None, None]
    n, k, h, w = y.shape
    hq, wq = h // 2, w // 2
    y = y[:, :, :2 * hq, :2 * wq].reshape(n, k, hq, 2, wq, 2)
    return jnp.max(y, axis=(3, 5))


if __name__ == "__main__":
    N, C, H, W = 2, 4, 16, 16
    K_OUT = 8

    key = jax.random.PRNGKey(0)
    kx, kp = jax.random.split(key)
    x_f32 = jax.random.normal(kx, (N, C, H, W), jnp.float32)
    w, b, scale, shift = init_transition_down_params(kp, C, K_OUT)

    # bf16 activations: halves HBM traffic for this memory-bound op (in a real
    # network the producing layer would already emit bf16).
    x = x_f32.astype(jnp.bfloat16)

    out = transition_down(x, w, b, scale, shift)
    out = jax.block_until_ready(out)
    assert out.shape == (N, K_OUT, H // 2, W // 2), out.shape

    # Reference: f32 math on the same bf16-rounded inputs the kernel consumes.
    ref = transition_down_reference(x, w.astype(jnp.bfloat16), b, scale, shift)
    ref = jax.block_until_ready(ref)
    err = float(jnp.max(jnp.abs(out.astype(jnp.float32) - ref)))
    assert jnp.allclose(out.astype(jnp.float32), ref, atol=5e-2, rtol=5e-2), err

    print("KERNEL_OK")
</pallas_src>

<mosaic_0001>
module attributes {stable_mosaic.version = 11 : i64} {
  func.func @kernel(%arg0: i32, %arg1: i32, %arg2: memref<8x4xbf16, #tpu.memory_space<vmem>>, %arg3: memref<8x1xf32, #tpu.memory_space<vmem>>, %arg4: memref<4x2xf32, #tpu.memory_space<vmem>>, %arg5: memref<15x8xbf16, #tpu.memory_space<vmem>>, %arg6: memref<1x4x256xbf16, #tpu.memory_space<vmem>>, %arg7: memref<1x8x64xbf16, #tpu.memory_space<vmem>>) attributes {dimension_semantics = [#tpu.dimension_semantics<parallel>, #tpu.dimension_semantics<parallel>], iteration_bounds = array<i64: 2, 1>, scalar_prefetch = 0 : i64, scratch_operands = 0 : i64, tpu.core_type = #tpu.core_type<tc>, window_params = [{pipeline_mode = #tpu.pipeline_mode<synchronous>, transform_indices = @transform_0, window_bounds = array<i64: 8, 4>}, {pipeline_mode = #tpu.pipeline_mode<synchronous>, transform_indices = @transform_1, window_bounds = array<i64: 8, 1>}, {pipeline_mode = #tpu.pipeline_mode<synchronous>, transform_indices = @transform_2, window_bounds = array<i64: 4, 2>}, {pipeline_mode = #tpu.pipeline_mode<synchronous>, transform_indices = @transform_3, window_bounds = array<i64: 15, 8>}, {transform_indices = @transform_4, window_bounds = array<i64: 1, 4, 256>}, {transform_indices = @transform_5, window_bounds = array<i64: 1, 8, 64>}]} {
    %c0 = arith.constant 0 : index
    %c0_0 = arith.constant 0 : index
    %c0_1 = arith.constant 0 : index
    %0 = vector.load %arg6[%c0, %c0_0, %c0_1] : memref<1x4x256xbf16, #tpu.memory_space<vmem>>, vector<1x4x256xbf16>
    %1 = vector.shape_cast %0 : vector<1x4x256xbf16> to vector<4x256xbf16>
    %2 = arith.extf %1 : vector<4x256xbf16> to vector<4x256xf32>
    %c0_2 = arith.constant 0 : index
    %c0_3 = arith.constant 0 : index
    %3 = vector.load %arg4[%c0_2, %c0_3] : memref<4x2xf32, #tpu.memory_space<vmem>>, vector<4x1xf32>
    %c0_4 = arith.constant 0 : index
    %c1 = arith.constant 1 : index
    %4 = vector.load %arg4[%c0_4, %c1] : memref<4x2xf32, #tpu.memory_space<vmem>>, vector<4x1xf32>
    %5 = vector.broadcast %3 : vector<4x1xf32> to vector<4x256xf32>
    %6 = arith.mulf %2, %5 : vector<4x256xf32>
    %7 = vector.broadcast %4 : vector<4x1xf32> to vector<4x256xf32>
    %8 = arith.addf %6, %7 : vector<4x256xf32>
    %cst = arith.constant 0.000000e+00 : f32
    %9 = vector.broadcast %cst : f32 to vector<4x256xf32>
    %10 = arith.maximumf %8, %9 : vector<4x256xf32>
    %11 = arith.truncf %10 : vector<4x256xf32> to vector<4x256xbf16>
    %c0_5 = arith.constant 0 : index
    %c0_6 = arith.constant 0 : index
    %12 = vector.load %arg2[%c0_5, %c0_6] : memref<8x4xbf16, #tpu.memory_space<vmem>>, vector<8x4xbf16>
    %cst_7 = arith.constant dense<0.000000e+00> : vector<8x256xf32>
    %13 = tpu.matmul %12, %11, %cst_7 {dimension_numbers = #tpu.dot_dimension_numbers<[1], [0], [0], [1], [0, 0, 1, 1], [], []>} : vector<8x4xbf16>, vector<4x256xbf16>, vector<8x256xf32> -> vector<8x256xf32>
    %c0_8 = arith.constant 0 : index
    %c0_9 = arith.constant 0 : index
    %14 = vector.load %arg3[%c0_8, %c0_9] : memref<8x1xf32, #tpu.memory_space<vmem>>, vector<8x1xf32>
    %15 = vector.broadcast %14 : vector<8x1xf32> to vector<8x256xf32>
    %16 = arith.addf %13, %15 : vector<8x256xf32>
    %17 = vector.extract_strided_slice %16 {offsets = [0, 0], sizes = [8, 239], strides = [1, 1]} : vector<8x256xf32> to vector<8x239xf32>
    %18 = vector.extract_strided_slice %16 {offsets = [0, 1], sizes = [8, 239], strides = [1, 1]} : vector<8x256xf32> to vector<8x239xf32>
    %19 = arith.maximumf %17, %18 : vector<8x239xf32>
    %20 = vector.extract_strided_slice %16 {offsets = [0, 16], sizes = [8, 239], strides = [1, 1]} : vector<8x256xf32> to vector<8x239xf32>
    %21 = vector.extract_strided_slice %16 {offsets = [0, 17], sizes = [8, 239], strides = [1, 1]} : vector<8x256xf32> to vector<8x239xf32>
    %22 = arith.maximumf %20, %21 : vector<8x239xf32>
    %23 = arith.maximumf %19, %22 : vector<8x239xf32>
    %24 = arith.truncf %23 : vector<8x239xf32> to vector<8x239xbf16>
    %25 = vector.extract_strided_slice %24 {offsets = [0, 0], sizes = [8, 15], strides = [1, 1]} : vector<8x239xbf16> to vector<8x15xbf16>
    %c0_10 = arith.constant 0 : index
    %c0_11 = arith.constant 0 : index
    %26 = vector.load %arg5[%c0_10, %c0_11] : memref<15x8xbf16, #tpu.memory_space<vmem>>, vector<15x8xbf16>
    %cst_12 = arith.constant dense<0.000000e+00> : vector<8x8xf32>
    %27 = tpu.matmul %25, %26, %cst_12 {dimension_numbers = #tpu.dot_dimension_numbers<[1], [0], [0], [1], [0, 0, 1, 1], [], []>} : vector<8x15xbf16>, vector<15x8xbf16>, vector<8x8xf32> -> vector<8x8xf32>
    %28 = arith.truncf %27 : vector<8x8xf32> to vector<8x8xbf16>
    %c0_13 = arith.constant 0 : index
    %c0_14 = arith.constant 0 : index
    %c0_15 = arith.constant 0 : index
    %29 = vector.load %arg7[%c0_13, %c0_14, %c0_15] : memref<1x8x64xbf16, #tpu.memory_space<vmem>>, vector<1x8x8xbf16>
    %30 = vector.shape_cast %29 : vector<1x8x8xbf16> to vector<8x8xbf16>
    %31 = vector.shape_cast %28 : vector<8x8xbf16> to vector<1x8x8xbf16>
    tpu.vector_store %arg7[%c0_13, %c0_14, %c0_15], %31 {strides = array<i32>} : memref<1x8x64xbf16, #tpu.memory_space<vmem>>, vector<1x8x8xbf16>,
    %32 = vector.extract_strided_slice %24 {offsets = [0, 32], sizes = [8, 15], strides = [1, 1]} : vector<8x239xbf16> to vector<8x15xbf16>
    %c0_16 = arith.constant 0 : index
    %c0_17 = arith.constant 0 : index
    %33 = vector.load %arg5[%c0_16, %c0_17] : memref<15x8xbf16, #tpu.memory_space<vmem>>, vector<15x8xbf16>
    %cst_18 = arith.constant dense<0.000000e+00> : vector<8x8xf32>
    %34 = tpu.matmul %32, %33, %cst_18 {dimension_numbers = #tpu.dot_dimension_numbers<[1], [0], [0], [1], [0, 0, 1, 1], [], []>} : vector<8x15xbf16>, vector<15x8xbf16>, vector<8x8xf32> -> vector<8x8xf32>
    %35 = arith.truncf %34 : vector<8x8xf32> to vector<8x8xbf16>
    %c0_19 = arith.constant 0 : index
    %c0_20 = arith.constant 0 : index
    %c8 = arith.constant 8 : index
    %36 = vector.load %arg7[%c0_19, %c0_20, %c8] : memref<1x8x64xbf16, #tpu.memory_space<vmem>>, vector<1x8x8xbf16>
    %37 = vector.shape_cast %36 : vector<1x8x8xbf16> to vector<8x8xbf16>
    %38 = vector.shape_cast %35 : vector<8x8xbf16> to vector<1x8x8xbf16>
    tpu.vector_store %arg7[%c0_19, %c0_20, %c8], %38 {strides = array<i32>} : memref<1x8x64xbf16, #tpu.memory_space<vmem>>, vector<1x8x8xbf16>,
    %39 = vector.extract_strided_slice %24 {offsets = [0, 64], sizes = [8, 15], strides = [1, 1]} : vector<8x239xbf16> to vector<8x15xbf16>
    %c0_21 = arith.constant 0 : index
    %c0_22 = arith.constant 0 : index
    %40 = vector.load %arg5[%c0_21, %c0_22] : memref<15x8xbf16, #tpu.memory_space<vmem>>, vector<15x8xbf16>
    %cst_23 = arith.constant dense<0.000000e+00> : vector<8x8xf32>
    %41 = tpu.matmul %39, %40, %cst_23 {dimension_numbers = #tpu.dot_dimension_numbers<[1], [0], [0], [1], [0, 0, 1, 1], [], []>} : vector<8x15xbf16>, vector<15x8xbf16>, vector<8x8xf32> -> vector<8x8xf32>
    %42 = arith.truncf %41 : vector<8x8xf32> to vector<8x8xbf16>
    %c0_24 = arith.constant 0 : index
    %c0_25 = arith.constant 0 : index
    %c16 = arith.constant 16 : index
    %43 = vector.load %arg7[%c0_24, %c0_25, %c16] : memref<1x8x64xbf16, #tpu.memory_space<vmem>>, vector<1x8x8xbf16>
    %44 = vector.shape_cast %43 : vector<1x8x8xbf16> to vector<8x8xbf16>
    %45 = vector.shape_cast %42 : vector<8x8xbf16> to vector<1x8x8xbf16>
    tpu.vector_store %arg7[%c0_24, %c0_25, %c16], %45 {strides = array<i32>} : memref<1x8x64xbf16, #tpu.memory_space<vmem>>, vector<1x8x8xbf16>,
    %46 = vector.extract_strided_slice %24 {offsets = [0, 96], sizes = [8, 15], strides = [1, 1]} : vector<8x239xbf16> to vector<8x15xbf16>
    %c0_26 = arith.constant 0 : index
    %c0_27 = arith.constant 0 : index
    %47 = vector.load %arg5[%c0_26, %c0_27] : memref<15x8xbf16, #tpu.memory_space<vmem>>, vector<15x8xbf16>
    %cst_28 = arith.constant dense<0.000000e+00> : vector<8x8xf32>
    %48 = tpu.matmul %46, %47, %cst_28 {dimension_numbers = #tpu.dot_dimension_numbers<[1], [0], [0], [1], [0, 0, 1, 1], [], []>} : vector<8x15xbf16>, vector<15x8xbf16>, vector<8x8xf32> -> vector<8x8xf32>
    %49 = arith.truncf %48 : vector<8x8xf32> to vector<8x8xbf16>
    %c0_29 = arith.constant 0 : index
    %c0_30 = arith.constant 0 : index
    %c24 = arith.constant 24 : index
    %50 = vector.load %arg7[%c0_29, %c0_30, %c24] : memref<1x8x64xbf16, #tpu.memory_space<vmem>>, vector<1x8x8xbf16>
    %51 = vector.shape_cast %50 : vector<1x8x8xbf16> to vector<8x8xbf16>
    %52 = vector.shape_cast %49 : vector<8x8xbf16> to vector<1x8x8xbf16>
    tpu.vector_store %arg7[%c0_29, %c0_30, %c24], %52 {strides = array<i32>} : memref<1x8x64xbf16, #tpu.memory_space<vmem>>, vector<1x8x8xbf16>,
    %53 = vector.extract_strided_slice %24 {offsets = [0, 128], sizes = [8, 15], strides = [1, 1]} : vector<8x239xbf16> to vector<8x15xbf16>
    %c0_31 = arith.constant 0 : index
    %c0_32 = arith.constant 0 : index
    %54 = vector.load %arg5[%c0_31, %c0_32] : memref<15x8xbf16, #tpu.memory_space<vmem>>, vector<15x8xbf16>
    %cst_33 = arith.constant dense<0.000000e+00> : vector<8x8xf32>
    %55 = tpu.matmul %53, %54, %cst_33 {dimension_numbers = #tpu.dot_dimension_numbers<[1], [0], [0], [1], [0, 0, 1, 1], [], []>} : vector<8x15xbf16>, vector<15x8xbf16>, vector<8x8xf32> -> vector<8x8xf32>
    %56 = arith.truncf %55 : vector<8x8xf32> to vector<8x8xbf16>
    %c0_34 = arith.constant 0 : index
    %c0_35 = arith.constant 0 : index
    %c32 = arith.constant 32 : index
    %57 = vector.load %arg7[%c0_34, %c0_35, %c32] : memref<1x8x64xbf16, #tpu.memory_space<vmem>>, vector<1x8x8xbf16>
    %58 = vector.shape_cast %57 : vector<1x8x8xbf16> to vector<8x8xbf16>
    %59 = vector.shape_cast %56 : vector<8x8xbf16> to vector<1x8x8xbf16>
    tpu.vector_store %arg7[%c0_34, %c0_35, %c32], %59 {strides = array<i32>} : memref<1x8x64xbf16, #tpu.memory_space<vmem>>, vector<1x8x8xbf16>,
    %60 = vector.extract_strided_slice %24 {offsets = [0, 160], sizes = [8, 15], strides = [1, 1]} : vector<8x239xbf16> to vector<8x15xbf16>
    %c0_36 = arith.constant 0 : index
    %c0_37 = arith.constant 0 : index
    %61 = vector.load %arg5[%c0_36, %c0_37] : memref<15x8xbf16, #tpu.memory_space<vmem>>, vector<15x8xbf16>
    %cst_38 = arith.constant dense<0.000000e+00> : vector<8x8xf32>
    %62 = tpu.matmul %60, %61, %cst_38 {dimension_numbers = #tpu.dot_dimension_numbers<[1], [0], [0], [1], [0, 0, 1, 1], [], []>} : vector<8x15xbf16>, vector<15x8xbf16>, vector<8x8xf32> -> vector<8x8xf32>
    %63 = arith.truncf %62 : vector<8x8xf32> to vector<8x8xbf16>
    %c0_39 = arith.constant 0 : index
    %c0_40 = arith.constant 0 : index
    %c40 = arith.constant 40 : index
    %64 = vector.load %arg7[%c0_39, %c0_40, %c40] : memref<1x8x64xbf16, #tpu.memory_space<vmem>>, vector<1x8x8xbf16>
    %65 = vector.shape_cast %64 : vector<1x8x8xbf16> to vector<8x8xbf16>
    %66 = vector.shape_cast %63 : vector<8x8xbf16> to vector<1x8x8xbf16>
    tpu.vector_store %arg7[%c0_39, %c0_40, %c40], %66 {strides = array<i32>} : memref<1x8x64xbf16, #tpu.memory_space<vmem>>, vector<1x8x8xbf16>,
    %67 = vector.extract_strided_slice %24 {offsets = [0, 192], sizes = [8, 15], strides = [1, 1]} : vector<8x239xbf16> to vector<8x15xbf16>
    %c0_41 = arith.constant 0 : index
    %c0_42 = arith.constant 0 : index
    %68 = vector.load %arg5[%c0_41, %c0_42] : memref<15x8xbf16, #tpu.memory_space<vmem>>, vector<15x8xbf16>
    %cst_43 = arith.constant dense<0.000000e+00> : vector<8x8xf32>
    %69 = tpu.matmul %67, %68, %cst_43 {dimension_numbers = #tpu.dot_dimension_numbers<[1], [0], [0], [1], [0, 0, 1, 1], [], []>} : vector<8x15xbf16>, vector<15x8xbf16>, vector<8x8xf32> -> vector<8x8xf32>
    %70 = arith.truncf %69 : vector<8x8xf32> to vector<8x8xbf16>
    %c0_44 = arith.constant 0 : index
    %c0_45 = arith.constant 0 : index
    %c48 = arith.constant 48 : index
    %71 = vector.load %arg7[%c0_44, %c0_45, %c48] : memref<1x8x64xbf16, #tpu.memory_space<vmem>>, vector<1x8x8xbf16>
    %72 = vector.shape_cast %71 : vector<1x8x8xbf16> to vector<8x8xbf16>
    %73 = vector.shape_cast %70 : vector<8x8xbf16> to vector<1x8x8xbf16>
    tpu.vector_store %arg7[%c0_44, %c0_45, %c48], %73 {strides = array<i32>} : memref<1x8x64xbf16, #tpu.memory_space<vmem>>, vector<1x8x8xbf16>,
    %74 = vector.extract_strided_slice %24 {offsets = [0, 224], sizes = [8, 15], strides = [1, 1]} : vector<8x239xbf16> to vector<8x15xbf16>
    %c0_46 = arith.constant 0 : index
    %c0_47 = arith.constant 0 : index
    %75 = vector.load %arg5[%c0_46, %c0_47] : memref<15x8xbf16, #tpu.memory_space<vmem>>, vector<15x8xbf16>
    %cst_48 = arith.constant dense<0.000000e+00> : vector<8x8xf32>
    %76 = tpu.matmul %74, %75, %cst_48 {dimension_numbers = #tpu.dot_dimension_numbers<[1], [0], [0], [1], [0, 0, 1, 1], [], []>} : vector<8x15xbf16>, vector<15x8xbf16>, vector<8x8xf32> -> vector<8x8xf32>
    %77 = arith.truncf %76 : vector<8x8xf32> to vector<8x8xbf16>
    %c0_49 = arith.constant 0 : index
    %c0_50 = arith.constant 0 : index
    %c56 = arith.constant 56 : index
    %78 = vector.load %arg7[%c0_49, %c0_50, %c56] : memref<1x8x64xbf16, #tpu.memory_space<vmem>>, vector<1x8x8xbf16>
    %79 = vector.shape_cast %78 : vector<1x8x8xbf16> to vector<8x8xbf16>
    %80 = vector.shape_cast %77 : vector<8x8xbf16> to vector<1x8x8xbf16>
    tpu.vector_store %arg7[%c0_49, %c0_50, %c56], %80 {strides = array<i32>} : memref<1x8x64xbf16, #tpu.memory_space<vmem>>, vector<1x8x8xbf16>,
    return
  }
  func.func @transform_0(%arg0: i32, %arg1: i32) -> (i32, i32) {
    %c0_i32 = arith.constant 0 : i32
    %c0_i32_0 = arith.constant 0 : i32
    %c0_i32_1 = arith.constant 0 : i32
    return %c0_i32, %c0_i32_0 : i32, i32
  }
  func.func @transform_1(%arg0: i32, %arg1: i32) -> (i32, i32) {
    %c0_i32 = arith.constant 0 : i32
    %c0_i32_0 = arith.constant 0 : i32
    %c0_i32_1 = arith.constant 0 : i32
    return %c0_i32, %c0_i32_0 : i32, i32
  }
  func.func @transform_2(%arg0: i32, %arg1: i32) -> (i32, i32) {
    %c0_i32 = arith.constant 0 : i32
    %c0_i32_0 = arith.constant 0 : i32
    %c0_i32_1 = arith.constant 0 : i32
    return %c0_i32, %c0_i32_0 : i32, i32
  }
  func.func @transform_3(%arg0: i32, %arg1: i32) -> (i32, i32) {
    %c0_i32 = arith.constant 0 : i32
    %c0_i32_0 = arith.constant 0 : i32
    %c0_i32_1 = arith.constant 0 : i32
    return %c0_i32, %c0_i32_0 : i32, i32
  }
  func.func @transform_4(%arg0: i32, %arg1: i32) -> (i32, i32, i32) {
    %c0_i32 = arith.constant 0 : i32
    %c0_i32_0 = arith.constant 0 : i32
    return %arg0, %c0_i32, %arg1 : i32, i32, i32
  }
  func.func @transform_5(%arg0: i32, %arg1: i32) -> (i32, i32, i32) {
    %c0_i32 = arith.constant 0 : i32
    %c0_i32_0 = arith.constant 0 : i32
    return %arg0, %c0_i32, %arg1 : i32, i32, i32
  }
}

</mosaic_0001>

<llo_original>
// kernel: tpu_custom_call.1
$region0: #{tpu_custom_call.1}
  #allocation0 [shape = 'u32[]', space=smem, size = 0x4, offset = 0x4, fixed_abs, tag = 'smem constant byte address 0x4 - core index']
  #allocation1 [shape = 'u32[72,128]{1,0:T(1,128)}', space=vmem, size = 0x9000, scoped, tag = 'internal scratch']
  %s0 = inlined_call_operand.vmem [shape: bf16[8,4], index: 0, kind: input, shape index: {}]
  %s1 = inlined_call_operand.vmem [shape: f32[8,1], index: 1, kind: input, shape index: {}]
  %s2 = inlined_call_operand.vmem [shape: f32[4,2], index: 2, kind: input, shape index: {}]
  %s3 = inlined_call_operand.vmem [shape: bf16[15,8], index: 3, kind: input, shape index: {}]
  %s4 = inlined_call_operand.vmem [shape: bf16[2,4,256], index: 4, kind: input, shape index: {}]
  %s5 = inlined_call_operand.hbm [shape: bf16[2,8,64], index: 5, kind: output, shape index: {}]
  %s6 = sld [smem:[#allocation0]]
  $region53: #{tpu_custom_call.1} parent=0
    _
  %s8 = ssub.s32 1, %s6
  %s9 = scalar_select 0, %s8, %s6
  $region1: #{tpu_custom_call.1} parent=0
    #allocation2 [shape = 'u8[4096]{0}', space=vmem, size = 0x1000, scoped, tag = 'output window, operand 0']
    #allocation3 [shape = 's32[2]{0}', space=sflag, size = 0x8, scoped, tag = 'scoped memory for tpu_custom_call.1']
    %10 = vsyncpa [#allocation3], 0
    %s11 = scalar_lea.sflag [#allocation3], 1
    %12 = vsyncpa %s11, 0
    loop: start=0, step=1, limit=4
    $region2: #{tpu_custom_call.1} parent=1 // loop_pre_header
      _
    $region3: #{tpu_custom_call.1} parent=1 // loop_header
      %s14 = sphi 0, %s18
      %p15 = scmp.ge.s32.totalorder %s14, 4
      %s21 = sphi 0, %s33
      %s22 = sphi 0, %s29
      %s23 = sphi 0, %s21
      %s24 = sphi 0, %s22
      %s25 = sphi 0, %s23
      %s26 = sphi 0, %s24
      %s34 = sphi 0, %s34
      %s36 = sphi 0, %s34
      %s37 = sphi 0, %s36
      %s51 = sphi 0, %s37
      %s55 = sphi 0, %s55
      %s57 = sphi 0, %s55
      %s58 = sphi 0, %s57
      %s72 = sphi 0, %s58
      %s76 = sphi 0, %s76
      %s78 = sphi 0, %s76
      %s79 = sphi 0, %s78
      %s93 = sphi 0, %s79
      %s97 = sphi 0, %s97
      %s99 = sphi 0, %s97
      %s100 = sphi 0, %s99
      %s114 = sphi 0, %s100
      %s122 = sphi 0, %s124
      %s125 = sphi 0, %s122
      %s126 = sphi 0, %s125
      %s142 = sphi 0, %s126
      %s150 = sphi 0, %s152
      %s153 = sphi 0, %s150
      %s154 = sphi 0, %s153
      %s170 = sphi 0, %s154
    $region4: #{tpu_custom_call.1} parent=1 // loop_header_branch
      %17 = sbr.rel (%p15) target = $region8
    $region5: #{tpu_custom_call.1} parent=1 // loop_body
      %s19 = ssub.s32 %s14, 1
      %s20 = ssub.s32 %s14, 2
      %s27 = sadd.s32 1, %s22
      %p28 = scmp.ge.s32.totalorder %s27, 1
      %s29 = scalar_select %p28, 0, %s27
      %s30 = sadd.s32 1, %s21
      %s31 = scalar_select %p28, %s30, %s21
      %p32 = scmp.ge.s32.totalorder %s31, 2
      %s33 = scalar_select %p32, 0, %s31
      %s35 = sadd.s32 %s34, 1
      %p38 = scmp.eq.s32.totalorder %s14, 1
      %p39 = scmp.ne.s32.totalorder %s34, %s36
      %p40 = scmp.eq.s32.totalorder %s14, 0
      %p41 = por %p39, %p40
      %p42 = scmp.ne.s32.totalorder %s34, %s36
      %p43 = scmp.eq.s32.totalorder %s19, 1
      %p44 = por %p42, %p43
      %p45 = scmp.ne.s32.totalorder %s36, %s37
      %p46 = scmp.eq.s32.totalorder %s19, 0
      %p47 = por %p45, %p46
      %p48 = scmp.ne.s32.totalorder %s36, %s37
      %p49 = scmp.eq.s32.totalorder %s20, 1
      %p50 = por %p48, %p49
      %p52 = scmp.ne.s32.totalorder %s37, %s51
      %p53 = scmp.eq.s32.totalorder %s20, 0
      %p54 = por %p52, %p53
      %s56 = sadd.s32 %s55, 1
      %p59 = scmp.eq.s32.totalorder %s14, 1
      %p60 = scmp.ne.s32.totalorder %s55, %s57
      %p61 = scmp.eq.s32.totalorder %s14, 0
      %p62 = por %p60, %p61
      %p63 = scmp.ne.s32.totalorder %s55, %s57
      %p64 = scmp.eq.s32.totalorder %s19, 1
      %p65 = por %p63, %p64
      %p66 = scmp.ne.s32.totalorder %s57, %s58
      %p67 = scmp.eq.s32.totalorder %s19, 0
      %p68 = por %p66, %p67
      %p69 = scmp.ne.s32.totalorder %s57, %s58
      %p70 = scmp.eq.s32.totalorder %s20, 1
      %p71 = por %p69, %p70
      %p73 = scmp.ne.s32.totalorder %s58, %s72
      %p74 = scmp.eq.s32.totalorder %s20, 0
      %p75 = por %p73, %p74
      %s77 = sadd.s32 %s76, 1
      %p80 = scmp.eq.s32.totalorder %s14, 1
      %p81 = scmp.ne.s32.totalorder %s76, %s78
      %p82 = scmp.eq.s32.totalorder %s14, 0
      %p83 = por %p81, %p82
      %p84 = scmp.ne.s32.totalorder %s76, %s78
      %p85 = scmp.eq.s32.totalorder %s19, 1
      %p86 = por %p84, %p85
      %p87 = scmp.ne.s32.totalorder %s78, %s79
      %p88 = scmp.eq.s32.totalorder %s19, 0
      %p89 = por %p87, %p88
      %p90 = scmp.ne.s32.totalorder %s78, %s79
      %p91 = scmp.eq.s32.totalorder %s20, 1
      %p92 = por %p90, %p91
      %p94 = scmp.ne.s32.totalorder %s79, %s93
      %p95 = scmp.eq.s32.totalorder %s20, 0
      %p96 = por %p94, %p95
      %s98 = sadd.s32 %s97, 1
      %p101 = scmp.eq.s32.totalorder %s14, 1
      %p102 = scmp.ne.s32.totalorder %s97, %s99
      %p103 = scmp.eq.s32.totalorder %s14, 0
      %p104 = por %p102, %p103
      %p105 = scmp.ne.s32.totalorder %s97, %s99
      %p106 = scmp.eq.s32.totalorder %s19, 1
      %p107 = por %p105, %p106
      %p108 = scmp.ne.s32.totalorder %s99, %s100
      %p109 = scmp.eq.s32.totalorder %s19, 0
      %p110 = por %p108, %p109
      %p111 = scmp.ne.s32.totalorder %s99, %s100
      %p112 = scmp.eq.s32.totalorder %s20, 1
      %p113 = por %p111, %p112
      %p115 = scmp.ne.s32.totalorder %s100, %s114
      %p116 = scmp.eq.s32.totalorder %s20, 0
      %p117 = por %p115, %p116
      %s118 = ssub.s32 %s21, %s33
      %s119 = ssub.s32 %s22, %s29
      %s120 = sor.u32 %s118, %s119
      %p121 = scmp.eq.s32.totalorder %s120, 0
      %s123 = sadd.s32 %s122, 1
      %s124 = scalar_select %p121, %s122, %s123
      %p127 = pneg %p121
      %p128 = scmp.eq.s32.totalorder %s14, 1
      %p129 = por %p127, %p128
      %p130 = scmp.ne.s32.totalorder %s122, %s125
      %p131 = scmp.eq.s32.totalorder %s14, 0
      %p132 = por %p130, %p131
      %p133 = scmp.ne.s32.totalorder %s122, %s125
      %p134 = scmp.eq.s32.totalorder %s19, 1
      %p135 = por %p133, %p134
      %p136 = scmp.ne.s32.totalorder %s125, %s126
      %p137 = scmp.eq.s32.totalorder %s19, 0
      %p138 = por %p136, %p137
      %p139 = scmp.ne.s32.totalorder %s125, %s126
      %p140 = scmp.eq.s32.totalorder %s20, 1
      %p141 = por %p139, %p140
      %p143 = scmp.ne.s32.totalorder %s126, %s142
      %p144 = scmp.eq.s32.totalorder %s20, 0
      %p145 = por %p143, %p144
      %s146 = ssub.s32 %s21, %s33
      %s147 = ssub.s32 %s22, %s29
      %s148 = sor.u32 %s146, %s147
      %p149 = scmp.eq.s32.totalorder %s148, 0
      %s151 = sadd.s32 %s150, 1
      %s152 = scalar_select %p149, %s150, %s151
      %p155 = pneg %p149
      %p156 = scmp.eq.s32.totalorder %s14, 1
      %p157 = por %p155, %p156
      %p158 = scmp.ne.s32.totalorder %s150, %s153
      %p159 = scmp.eq.s32.totalorder %s14, 0
      %p160 = por %p158, %p159
      %p161 = scmp.ne.s32.totalorder %s150, %s153
      %p162 = scmp.eq.s32.totalorder %s19, 1
      %p163 = por %p161, %p162
      %p164 = scmp.ne.s32.totalorder %s153, %s154
      %p165 = scmp.eq.s32.totalorder %s19, 0
      %p166 = por %p164, %p165
      %p167 = scmp.ne.s32.totalorder %s153, %s154
      %p168 = scmp.eq.s32.totalorder %s20, 1
      %p169 = por %p167, %p168
      %p171 = scmp.ne.s32.totalorder %s154, %s170
      %p172 = scmp.eq.s32.totalorder %s20, 0
      %p173 = por %p171, %p172
      %p174 = scmp.le.s32.totalorder 1, %s14
      %p175 = scmp.lt.s32.totalorder %s14, 3
      %p176 = pnand %p174, %p175
      %p177 = pneg %p176
      // Predicated region
      $region9: #{tpu_custom_call.1} parent=5 // pred_check
        _
      $region10: #{tpu_custom_call.1} parent=5 // pred_check_branch
        %179 = sbr.rel (%p176) target = $region12
      $region11: #{tpu_custom_call.1} parent=5 // pred_region
        %s180 = ssub.s32 %s14, 1
        // Predicated region
        $region13: #{tpu_custom_call.1} parent=11 // pred_check
          %p181 = pneg %p47
        $region14: #{tpu_custom_call.1} parent=11 // pred_check_branch
          %183 = sbr.rel (%p181) target = $region16
        $region15: #{tpu_custom_call.1} parent=11 // pred_region
          _
        $region16: #{tpu_custom_call.1} parent=11 // pred_fallthru
          _
        // Predicated region
        $region17: #{tpu_custom_call.1} parent=11 // pred_check
          %p184 = pneg %p68
        $region18: #{tpu_custom_call.1} parent=11 // pred_check_branch
          %186 = sbr.rel (%p184) target = $region20
        $region19: #{tpu_custom_call.1} parent=11 // pred_region
          _
        $region20: #{tpu_custom_call.1} parent=11 // pred_fallthru
          _
        // Predicated region
        $region21: #{tpu_custom_call.1} parent=11 // pred_check
          %p187 = pneg %p89
        $region22: #{tpu_custom_call.1} parent=11 // pred_check_branch
          %189 = sbr.rel (%p187) target = $region24
        $region23: #{tpu_custom_call.1} parent=11 // pred_region
          _
        $region24: #{tpu_custom_call.1} parent=11 // pred_fallthru
          _
        // Predicated region
        $region25: #{tpu_custom_call.1} parent=11 // pred_check
          %p190 = pneg %p110
        $region26: #{tpu_custom_call.1} parent=11 // pred_check_branch
          %192 = sbr.rel (%p190) target = $region28
        $region27: #{tpu_custom_call.1} parent=11 // pred_region
          _
        $region28: #{tpu_custom_call.1} parent=11 // pred_fallthru
          _
      $region12: #{tpu_custom_call.1} parent=5 // pred_fallthru
        _
      %p193 = scmp.lt.s32.totalorder %s14, 2
      // Predicated region
      $region29: #{tpu_custom_call.1} parent=5 // pred_check
        %p194 = pneg %p193
      $region30: #{tpu_custom_call.1} parent=5 // pred_check_branch
        %196 = sbr.rel (%p194) target = $region32
      $region31: #{tpu_custom_call.1} parent=5 // pred_region
        // Predicated region
        $region33: #{tpu_custom_call.1} parent=31 // pred_check
          %p197 = pneg %p132
        $region34: #{tpu_custom_call.1} parent=31 // pred_check_branch
          %199 = sbr.rel (%p197) target = $region36
        $region35: #{tpu_custom_call.1} parent=31 // pred_region
          %s200 = smul.u32 2, %s22
          %p201 = scmp.lt.s32.totalorder %s21, 1
          %s202 = scalar_select %p201, %s21, 1
          %p203 = scmp.lt.s32.totalorder %s200, 1
          %s204 = scalar_select %p203, %s200, 1
          %s205 = smul.addr %s202, 2
          %s206 = sadd.s32 %s204, %s205
          %s207 = smul.addr %s206, 2
          %s208 = scalar_lea.vmem %s4, %s207
          %s209 = smul.u32 2, %s22
        $region36: #{tpu_custom_call.1} parent=31 // pred_fallthru
          _
      $region32: #{tpu_custom_call.1} parent=5 // pred_fallthru
        _
      %p210 = scmp.le.s32.totalorder 1, %s14
      %p211 = scmp.lt.s32.totalorder %s14, 3
      %p212 = pnand %p210, %p211
      %p213 = pneg %p212
      // Predicated region
      $region37: #{tpu_custom_call.1} parent=5 // pred_check
        _
      $region38: #{tpu_custom_call.1} parent=5 // pred_check_branch
        %215 = sbr.rel (%p212) target = $region40
      $region39: #{tpu_custom_call.1} parent=5 // pred_region
        %s216 = ssub.s32 %s14, 1
        %p217 = pneg %p47
        %p218 = pneg %p44
        %p219 = pneg %p68
        %p220 = pneg %p65
        %p221 = pneg %p89
        %p222 = pneg %p86
        %p223 = pneg %p110
        %p224 = pneg %p107
        %s225 = smul.u32 2, %s24
        %p226 = scmp.lt.s32.totalorder %s23, 1
        %s227 = scalar_select %p226, %s23, 1
        %p228 = scmp.lt.s32.totalorder %s225, 1
        %s229 = scalar_select %p228, %s225, 1
        %s230 = smul.addr %s227, 2
        %s231 = sadd.s32 %s229, %s230
        %s232 = smul.addr %s231, 2
        %s233 = scalar_lea.vmem %s4, %s232
        %p234 = pneg %p138
        %p235 = pneg %p135
        %p236 = pneg %p166
        %p237 = pneg %p163
        %s238 = sand.u32 %s153, 1
        %s239 = scalar_lea.sflag [#allocation3], %s238
        %s240 = sand.u32 %s153, 1
        %s241 = smul.addr %s240, 4
        %s242 = scalar_lea.vmem [#allocation2], %s241
        %s243 = smul.u32 2, %s24
        %p244 = scmp.lt.s32.totalorder %s23, 1
        %s245 = scalar_select %p244, %s23, 1
        %p246 = scmp.lt.s32.totalorder %s243, 1
        %s247 = scalar_select %p246, %s243, 1
        %s248 = smul.addr %s245, 2
        %s249 = sadd.s32 %s247, %s248
        %s250 = smul.addr %s249, 2
        %s251 = scalar_lea.vmem %s4, %s250
        %s252 = smul.u32 2, %s24
        %v254 = vld [vmem:[%s251] sm:$0xf]
        %v255 = vunpack.c.l.bf16 %v254
        %v256 = vld [vmem:[%s2] sm:$0xf]
        %258 = vset.pattern.permute.xlu0 0
        %259 = vperm.xlu0 %258, %v256
        %v260 = vpop.permute.xlu0 %259
        %v262 = vunpack.c.l.s4 839922192
        %v263 = vunpack.c.0.s8 %v262
        %v264 = vperm.slane %v260, %v263
        %v266 = vmul.f32 %v255, %v264
        %267 = vset.pattern.permute.xlu0 1
        %268 = vperm.xlu0 %267, %v256
        %v269 = vpop.permute.xlu0 %268
        %v271 = vunpack.c.l.s4 839922192
        %v272 = vunpack.c.0.s8 %v271
        %v273 = vperm.slane %v269, %v272
        %v275 = vadd.f32 %v266, %v273
        %v276 = vmax.f32 %v275, 0.0
        %278 = vst [vmem:[#allocation1] ss:$2 sm:$0xff] %v276
        %v279 = vld.sshfl [vmem:[#allocation1] sm:$0xff pattern:$0x75316420]
        %v280 = vld.sshfl [vmem:[#allocation1 + $0x8] sm:$0xff pattern:$0x75316420]
        %v283 = vpack.c.bf16 %v279, %v279
        %v284 = vpack.c.bf16 %v280, %v280
        %v285 = vld [vmem:[%s0] sm:$0xf]
        %v286 = vld [vmem:[%s1] sm:$0xff]
        %288 = vset.pattern.permute.xlu0 0
        %289 = vperm.xlu0 %288, %v286
        %v290 = vpop.permute.xlu0 %289
        %vm292 = vcmask 31744
        %v294 = vsel %vm292, %v285, 0
        %vm296 = vcmask 1041408
        %v298 = vsel %vm296, %v283, 0
        %v301 = vsel %vm296, %v284, 0
        %303 = vmatpush.bf16.msra.mxu0 0
        %304 = vmatpush.bf16.msra.mxu0 0
        %305 = vmatpush.bf16.msra.mxu0 0
        %306 = vmatpush.bf16.msra.mxu0 0
        %307 = vmatpush.bf16.msra.mxu0 0
        %308 = vmatpush.bf16.msra.mxu0 0
        %309 = vmatpush.bf16.msra.mxu0 0
        %310 = vmatpush.bf16.msra.mxu0 %v298
        %311 = vmatmul.bf16.gmra.mxu0 %v294
        %v312 = vpop.f32.mrf.mxu0
        %v313 = vadd.f32 %v290, %v312
        %v314 = vpop.f32.mrf.mxu0
        %315 = vdwg.mxu0
        %316 = vmatpush.bf16.msra.mxu0 0
        %317 = vmatpush.bf16.msra.mxu0 0
        %318 = vmatpush.bf16.msra.mxu0 0
        %319 = vmatpush.bf16.msra.mxu0 0
        %320 = vmatpush.bf16.msra.mxu0 0
        %321 = vmatpush.bf16.msra.mxu0 0
        %322 = vmatpush.bf16.msra.mxu0 0
        %323 = vmatpush.bf16.msra.mxu0 %v301
        %324 = vmatmul.bf16.gmra.mxu0 %v294
        %v325 = vpop.f32.mrf.mxu0
        %v326 = vadd.f32 %v290, %v325
        %v327 = vpop.f32.mrf.mxu0
        %328 = vdwg.mxu0
        %331 = vrot.lane.b32.xlu0 %v313, 127
        %v332 = vpop.permute.xlu0 %331
        %333 = vrot.lane.b32.xlu0 %v326, 127
        %v334 = vpop.permute.xlu0 %333
        %vm335 = vcmask 1039360
        %v336 = vsel %vm335, %v332, %v334
        %v339 = vmax.f32 %v313, %v336
        %v340 = vmax.f32 %v326, %v334
        %343 = vrot.lane.b32.xlu0 %v339, 112
        %v344 = vpop.permute.xlu0 %343
        %345 = vrot.lane.b32.xlu0 %v340, 112
        %v346 = vpop.permute.xlu0 %345
        %vm347 = vcmask 916480
        %v348 = vsel %vm347, %v344, %v346
        %v351 = vmax.f32 %v339, %v348
        %v352 = vmax.f32 %v340, %v346
        %v353 = vpack.c.bf16 %v352, %v351
        %v354 = vld [vmem:[%s3] sm:$0xf]
        %v355 = vld [vmem:[%s3 + $0x4] sm:$0xf]
        %v358 = vunpack.c.l.b16 %v354
        %v359 = vunpack.c.l.b16 %v355
        %v360 = vpack.c.b16 %v359, %v358
        %vm361 = vcmask 121856
        %v363 = vsel %vm361, %v353, 0
        %vm365 = vcmask 1046528
        %vm366 = vcmask 1047552
        %v367 = vsel %vm365, 4294967295, 65535
        %v368 = vsel %vm366, %v367, 0
        %v370 = vand.u32 %v360, %v368
        %372 = vmatpush.bf16.msra.mxu0 0
        %373 = vmatpush.bf16.msra.mxu0 0
        %374 = vmatpush.bf16.msra.mxu0 0
        %375 = vmatpush.bf16.msra.mxu0 0
        %376 = vmatpush.bf16.msra.mxu0 0
        %377 = vmatpush.bf16.msra.mxu0 0
        %378 = vmatpush.bf16.msra.mxu0 0
        %379 = vmatpush.bf16.msra.mxu0 %v370
        %380 = vmatmul.bf16.gmra.mxu0 %v363
        %v381 = vpop.f32.mrf.mxu0
        %v382 = vadd.f32 0.0, %v381
        %v383 = vpop.f32.mrf.mxu0
        %384 = vdwg.mxu0
        %v385 = vpack.c.bf16 %v382, %v382
        %vm386 = vcmask 60416
        %387 = vst.msk [vmem:[%s242] sm:$0xf] %vm386, %v385
        %v388 = vld [vmem:[%s3] sm:$0xf]
        %v389 = vld [vmem:[%s3 + $0x4] sm:$0xf]
        %v391 = vunpack.c.l.b16 %v353
        %v392 = vpack.c.b16 %v391, %v391
        %393 = vrot.lane.b32.xlu0 %v392, 96
        %v394 = vpop.permute.xlu0 %393
        %v397 = vunpack.c.l.b16 %v388
        %v398 = vunpack.c.l.b16 %v389
        %v399 = vpack.c.b16 %v398, %v397
        %v401 = vsel %vm361, %v394, 0
        %v404 = vand.u32 %v399, %v368
        %406 = vmatpush.bf16.msra.mxu0 0
        %407 = vmatpush.bf16.msra.mxu0 0
        %408 = vmatpush.bf16.msra.mxu0 0
        %409 = vmatpush.bf16.msra.mxu0 0
        %410 = vmatpush.bf16.msra.mxu0 0
        %411 = vmatpush.bf16.msra.mxu0 0
        %412 = vmatpush.bf16.msra.mxu0 0
        %413 = vmatpush.bf16.msra.mxu0 %v404
        %414 = vmatmul.bf16.gmra.mxu0 %v401
        %v415 = vpop.f32.mrf.mxu0
        %v416 = vadd.f32 0.0, %v415
        %v417 = vpop.f32.mrf.mxu0
        %418 = vdwg.mxu0
        %v419 = vpack.c.bf16 %v416, %v416
        %421 = vrot.lane.b32.xlu0 %v419, 8
        %v422 = vpop.permute.xlu0 %421
        %vm424 = vcmask 126016
        %425 = vst.msk [vmem:[%s242] sm:$0xf] %vm424, %v422
        %v426 = vld [vmem:[%s3] sm:$0xf]
        %v427 = vld [vmem:[%s3 + $0x4] sm:$0xf]
        %428 = vrot.lane.b32.xlu0 %v392, 64
        %v429 = vpop.permute.xlu0 %428
        %v432 = vunpack.c.l.b16 %v426
        %v433 = vunpack.c.l.b16 %v427
        %v434 = vpack.c.b16 %v433, %v432
        %v436 = vsel %vm361, %v429, 0
        %v439 = vand.u32 %v434, %v368
        %441 = vmatpush.bf16.msra.mxu0 0
        %442 = vmatpush.bf16.msra.mxu0 0
        %443 = vmatpush.bf16.msra.mxu0 0
        %444 = vmatpush.bf16.msra.mxu0 0
        %445 = vmatpush.bf16.msra.mxu0 0
        %446 = vmatpush.bf16.msra.mxu0 0
        %447 = vmatpush.bf16.msra.mxu0 0
        %448 = vmatpush.bf16.msra.mxu0 %v439
        %449 = vmatmul.bf16.gmra.mxu0 %v436
        %v450 = vpop.f32.mrf.mxu0
        %v451 = vadd.f32 0.0, %v450
        %v452 = vpop.f32.mrf.mxu0
        %453 = vdwg.mxu0
        %v454 = vpack.c.bf16 %v451, %v451
        %456 = vrot.lane.b32.xlu0 %v454, 16
        %v457 = vpop.permute.xlu0 %456
        %vm459 = vcmask 191616
        %460 = vst.msk [vmem:[%s242] sm:$0xf] %vm459, %v457
        %v461 = vld [vmem:[%s3] sm:$0xf]
        %v462 = vld [vmem:[%s3 + $0x4] sm:$0xf]
        %463 = vrot.lane.b32.xlu0 %v392, 32
        %v464 = vpop.permute.xlu0 %463
        %v467 = vunpack.c.l.b16 %v461
        %v468 = vunpack.c.l.b16 %v462
        %v469 = vpack.c.b16 %v468, %v467
        %v471 = vsel %vm361, %v464, 0
        %v474 = vand.u32 %v469, %v368
        %476 = vmatpush.bf16.msra.mxu0 0
        %477 = vmatpush.bf16.msra.mxu0 0
        %478 = vmatpush.bf16.msra.mxu0 0
        %479 = vmatpush.bf16.msra.mxu0 0
        %480 = vmatpush.bf16.msra.mxu0 0
        %481 = vmatpush.bf16.msra.mxu0 0
        %482 = vmatpush.bf16.msra.mxu0 0
        %483 = vmatpush.bf16.msra.mxu0 %v474
        %484 = vmatmul.bf16.gmra.mxu0 %v471
        %v485 = vpop.f32.mrf.mxu0
        %v486 = vadd.f32 0.0, %v485
        %v487 = vpop.f32.mrf.mxu0
        %488 = vdwg.mxu0
        %v489 = vpack.c.bf16 %v486, %v486
        %491 = vrot.lane.b32.xlu0 %v489, 24
        %v492 = vpop.permute.xlu0 %491
        %vm494 = vcmask 257216
        %495 = vst.msk [vmem:[%s242] sm:$0xf] %vm494, %v492
        %v496 = vld [vmem:[%s3] sm:$0xf]
        %v497 = vld [vmem:[%s3 + $0x4] sm:$0xf]
        %v498 = vunpack.c.h.b16 %v353
        %v499 = vpack.c.b16 %v498, %v498
        %v502 = vunpack.c.l.b16 %v496
        %v503 = vunpack.c.l.b16 %v497
        %v504 = vpack.c.b16 %v503, %v502
        %v506 = vsel %vm361, %v499, 0
        %v509 = vand.u32 %v504, %v368
        %511 = vmatpush.bf16.msra.mxu0 0
        %512 = vmatpush.bf16.msra.mxu0 0
        %513 = vmatpush.bf16.msra.mxu0 0
        %514 = vmatpush.bf16.msra.mxu0 0
        %515 = vmatpush.bf16.msra.mxu0 0
        %516 = vmatpush.bf16.msra.mxu0 0
        %517 = vmatpush.bf16.msra.mxu0 0
        %518 = vmatpush.bf16.msra.mxu0 %v509
        %519 = vmatmul.bf16.gmra.mxu0 %v506
        %v520 = vpop.f32.mrf.mxu0
        %v521 = vadd.f32 0.0, %v520
        %v522 = vpop.f32.mrf.mxu0
        %523 = vdwg.mxu0
        %v524 = vpack.c.bf16 %v521, %v521
        %526 = vrot.lane.b32.xlu0 %v524, 32
        %v527 = vpop.permute.xlu0 %526
        %vm529 = vcmask 322816
        %530 = vst.msk [vmem:[%s242] sm:$0xf] %vm529, %v527
        %v531 = vld [vmem:[%s3] sm:$0xf]
        %v532 = vld [vmem:[%s3 + $0x4] sm:$0xf]
        %533 = vrot.lane.b32.xlu0 %v499, 96
        %v534 = vpop.permute.xlu0 %533
        %v537 = vunpack.c.l.b16 %v531
        %v538 = vunpack.c.l.b16 %v532
        %v539 = vpack.c.b16 %v538, %v537
        %v541 = vsel %vm361, %v534, 0
        %v544 = vand.u32 %v539, %v368
        %546 = vmatpush.bf16.msra.mxu0 0
        %547 = vmatpush.bf16.msra.mxu0 0
        %548 = vmatpush.bf16.msra.mxu0 0
        %549 = vmatpush.bf16.msra.mxu0 0
        %550 = vmatpush.bf16.msra.mxu0 0
        %551 = vmatpush.bf16.msra.mxu0 0
        %552 = vmatpush.bf16.msra.mxu0 0
        %553 = vmatpush.bf16.msra.mxu0 %v544
        %554 = vmatmul.bf16.gmra.mxu0 %v541
        %v555 = vpop.f32.mrf.mxu0
        %v556 = vadd.f32 0.0, %v555
        %v557 = vpop.f32.mrf.mxu0
        %558 = vdwg.mxu0
        %v559 = vpack.c.bf16 %v556, %v556
        %561 = vrot.lane.b32.xlu0 %v559, 40
        %v562 = vpop.permute.xlu0 %561
        %vm564 = vcmask 388416
        %565 = vst.msk [vmem:[%s242] sm:$0xf] %vm564, %v562
        %v566 = vld [vmem:[%s3] sm:$0xf]
        %v567 = vld [vmem:[%s3 + $0x4] sm:$0xf]
        %568 = vrot.lane.b32.xlu0 %v499, 64
        %v569 = vpop.permute.xlu0 %568
        %v572 = vunpack.c.l.b16 %v566
        %v573 = vunpack.c.l.b16 %v567
        %v574 = vpack.c.b16 %v573, %v572
        %v576 = vsel %vm361, %v569, 0
        %v579 = vand.u32 %v574, %v368
        %581 = vmatpush.bf16.msra.mxu0 0
        %582 = vmatpush.bf16.msra.mxu0 0
        %583 = vmatpush.bf16.msra.mxu0 0
        %584 = vmatpush.bf16.msra.mxu0 0
        %585 = vmatpush.bf16.msra.mxu0 0
        %586 = vmatpush.bf16.msra.mxu0 0
        %587 = vmatpush.bf16.msra.mxu0 0
        %588 = vmatpush.bf16.msra.mxu0 %v579
        %589 = vmatmul.bf16.gmra.mxu0 %v576
        %v590 = vpop.f32.mrf.mxu0
        %v591 = vadd.f32 0.0, %v590
        %v592 = vpop.f32.mrf.mxu0
        %593 = vdwg.mxu0
        %v594 = vpack.c.bf16 %v591, %v591
        %596 = vrot.lane.b32.xlu0 %v594, 48
        %v597 = vpop.permute.xlu0 %596
        %vm599 = vcmask 454016
        %600 = vst.msk [vmem:[%s242] sm:$0xf] %vm599, %v597
        %v601 = vld [vmem:[%s3] sm:$0xf]
        %v602 = vld [vmem:[%s3 + $0x4] sm:$0xf]
        %603 = vrot.lane.b32.xlu0 %v499, 32
        %v604 = vpop.permute.xlu0 %603
        %v607 = vunpack.c.l.b16 %v601
        %v608 = vunpack.c.l.b16 %v602
        %v609 = vpack.c.b16 %v608, %v607
        %v611 = vsel %vm361, %v604, 0
        %v614 = vand.u32 %v609, %v368
        %616 = vmatpush.bf16.msra.mxu0 0
        %617 = vmatpush.bf16.msra.mxu0 0
        %618 = vmatpush.bf16.msra.mxu0 0
        %619 = vmatpush.bf16.msra.mxu0 0
        %620 = vmatpush.bf16.msra.mxu0 0
        %621 = vmatpush.bf16.msra.mxu0 0
        %622 = vmatpush.bf16.msra.mxu0 0
        %623 = vmatpush.bf16.msra.mxu0 %v614
        %624 = vmatmul.bf16.gmra.mxu0 %v611
        %v625 = vpop.f32.mrf.mxu0
        %v626 = vadd.f32 0.0, %v625
        %v627 = vpop.f32.mrf.mxu0
        %628 = vdwg.mxu0
        %v629 = vpack.c.bf16 %v626, %v626
        %631 = vrot.lane.b32.xlu0 %v629, 56
        %v632 = vpop.permute.xlu0 %631
        %vm634 = vcmask 519616
        %635 = vst.msk [vmem:[%s242] sm:$0xf] %vm634, %v632
        %s636 = sand.u32 %s153, 1
        %s637 = scalar_lea.sflag [#allocation3], %s636
        %s638 = sand.u32 %s153, 1
        %s639 = smul.addr %s638, 4
        %s640 = scalar_lea.vmem [#allocation2], %s639
        // Predicated region
        $region41: #{tpu_custom_call.1} parent=39 // pred_check
          %p641 = pneg %p163
        $region42: #{tpu_custom_call.1} parent=39 // pred_check_branch
          %643 = sbr.rel (%p641) target = $region44
        $region43: #{tpu_custom_call.1} parent=39 // pred_region
          %645 = vsyncadd %s637, 0
          %s646 = sadd.s32 %s24, %s23
          %s647 = smul.addr %s646, 4
          %s648 = scalar_lea.hbm %s5, %s647
          %s650 = sshll.u32 %s640, 4
          %s651 = int_to_ptr.vmem [resolvable:$true] %s650
          %s652 = sshll.u32 %s648, 4
          %s653 = int_to_ptr.hbm [resolvable:$true] %s652
          %655 = dma.vmem_to_hbm [thread:$0]  %s651, 64, %s653, %s637
        $region44: #{tpu_custom_call.1} parent=39 // pred_fallthru
          _
      $region40: #{tpu_custom_call.1} parent=5 // pred_fallthru
        _
      %p656 = scmp.le.s32.totalorder 2, %s14
      // Predicated region
      $region45: #{tpu_custom_call.1} parent=5 // pred_check
        %p657 = pneg %p656
      $region46: #{tpu_custom_call.1} parent=5 // pred_check_branch
        %659 = sbr.rel (%p657) target = $region48
      $region47: #{tpu_custom_call.1} parent=5 // pred_region
        %s660 = ssub.s32 %s14, 2
        // Predicated region
        $region49: #{tpu_custom_call.1} parent=47 // pred_check
          %p661 = pneg %p169
        $region50: #{tpu_custom_call.1} parent=47 // pred_check_branch
          %663 = sbr.rel (%p661) target = $region52
        $region51: #{tpu_custom_call.1} parent=47 // pred_region
          %s664 = sand.u32 %s154, 1
          %s665 = scalar_lea.sflag [#allocation3], %s664
          %s666 = sand.u32 %s154, 1
          %s667 = smul.addr %s666, 4
          %s668 = scalar_lea.vmem [#allocation2], %s667
          %670 = dma.done %s665, 64
        $region52: #{tpu_custom_call.1} parent=47 // pred_fallthru
          _
      $region48: #{tpu_custom_call.1} parent=5 // pred_fallthru
        _
    $region6: #{tpu_custom_call.1} parent=1 // loop_footer
      %s18 = sadd.s32 1, %s14
    $region7: #{tpu_custom_call.1} parent=1 // loop_footer_branch
      %13 = sbr.rel target = $region3
    $region8: #{tpu_custom_call.1} parent=1 // loop_exit
      _
    %671 = vsyncpa [#allocation3], 1
    %s672 = scalar_lea.sflag [#allocation3], 1
    %673 = vsyncpa %s672, 1

</llo_original>
